<compile_context>
chip_gen: v5e
topology: v5e:2x2
jax: 0.10.0
libtpu: 0.0.40
codegen_flags: <defaults>
</compile_context>

<pallas_src>
import math
from functools import partial

import jax
import jax.numpy as jnp
from jax import lax
from jax.experimental import pallas as pl
from jax.experimental.pallas import tpu as pltpu


def _round_up(x, m):
    return ((x + m - 1) // m) * m


_VMEM_LIMIT = None


def _vmem_limit():
    """Scoped-VMEM limit sized from the actual part (leaves 16 MiB headroom)."""
    global _VMEM_LIMIT
    if _VMEM_LIMIT is None:
        try:
            cap = int(pltpu.get_tpu_info().vmem_capacity_bytes)
        except Exception:
            cap = 64 * 1024 * 1024
        _VMEM_LIMIT = max(32 * 1024 * 1024,
                          min(cap - 16 * 1024 * 1024, 112 * 1024 * 1024))
    return _VMEM_LIMIT


# ---------------------------------------------------------------------------
# Flat zero-bordered scratch geometry + in-kernel 3x3 conv helpers
# ---------------------------------------------------------------------------
def _flat_geom(H, W):
    """Geometry of the flat (row-major) zero-bordered scratch for a 3x3 conv.

    The (H+2, W+2, C) padded image is stored as a 2-D (rows, C) buffer with C
    on the lane axis.  `lead` is chosen so the interior writeback offset
    (lead + Wp + 1) is a multiple of 8 -> unmasked, sublane-aligned stores.
    """
    Wp = W + 2
    lead = (-(Wp + 1)) % 8
    rows = _round_up(lead + (H + 2) * Wp + 2, 8)
    return Wp, lead, rows


def _conv3x3_flat(pad_ref, wsel, H, W, cout, lead):
    """9-tap 3x3 'same' conv over the flat padded scratch.

    Returns a flat (H*Wp, cout) fp32 accumulator.  Rows r with (r % Wp) >= W
    are junk (row-wrapped windows); they are masked on writeback or dropped
    when the output is sliced.  Each tap is a single shifted contiguous window
    read -- no per-tap 2-D slice + reshape relayout.
    """
    Wp = W + 2
    HWp = H * Wp
    acc = jnp.zeros((HWp, cout), jnp.float32)
    for dy in range(3):
        for dx in range(3):
            patch = pad_ref[pl.ds(lead + dy * Wp + dx, HWp), :]   # bf16
            acc = acc + jnp.dot(patch, wsel(dy, dx),
                                preferred_element_type=jnp.float32)
    return acc


def _fill_interior(pad_ref, row_fn, H, W, lead):
    """Write the (H, W, C) level block row-by-row into the scratch interior."""
    Wp = W + 2
    ioff = lead + Wp + 1
    for y in range(H):
        pad_ref[pl.ds(ioff + y * Wp, W), :] = row_fn(y)


# ---------------------------------------------------------------------------
# Fused HeadShared kernel: 4x (conv3x3 + ReLU) -> final conv3x3 (-> sigmoid)
# ---------------------------------------------------------------------------
def _make_head_kernel(H, W, C, coutp, fuse_sigmoid, lead):
    Wp = W + 2
    HWp = H * Wp
    ioff = lead + Wp + 1            # multiple of 8 -> aligned writebacks

    def kernel(x_ref, wc_ref, bc_ref, wf_ref, bf_ref, o_ref, pad_ref):
        # x_ref : (1, H, W, C)      bf16
        # wc_ref: (4, 3, 3, C, C)   bf16   4 inner conv weights
        # bc_ref: (4, 1, C)         f32
        # wf_ref: (3, 3, C, coutp)  bf16   final conv (lane-padded cout)
        # bf_ref: (1, coutp)        f32
        # o_ref : (1, H, W, coutp)  bf16
        # pad_ref: (rows, C)        bf16   flat zero-bordered scratch

        # One-time zero of the border / halo regions (grid axis is sequential,
        # so the zeros persist; the interior is rewritten every step and the
        # masked writebacks keep the side borders zero).
        @pl.when(pl.program_id(0) == 0)
        def _():
            pad_ref[...] = jnp.zeros_like(pad_ref)

        # keep-mask over flat rows: rows landing on side borders -> zero.
        keep = (lax.broadcasted_iota(jnp.int32, (HWp, 1), 0) % Wp) < W

        _fill_interior(pad_ref, lambda y: x_ref[0, y], H, W, lead)

        # 4 x (conv3x3 + bias + ReLU); activations written back as bf16.
        for i in range(4):
            acc = _conv3x3_flat(pad_ref,
                                lambda dy, dx, i=i: wc_ref[i, dy, dx],
                                H, W, C, lead)
            acc = jnp.maximum(acc + bc_ref[i], 0.0)
            pad_ref[pl.ds(ioff, HWp), :] = jnp.where(
                keep, acc, 0.0).astype(pad_ref.dtype)

        # final conv3x3 (+ bias, + numerically stable sigmoid for cls head)
        acc = _conv3x3_flat(pad_ref, lambda dy, dx: wf_ref[dy, dx],
                            H, W, coutp, lead)
        acc = acc + bf_ref[...]
        if fuse_sigmoid:
            pos = acc >= 0.0
            z = jnp.exp(jnp.where(pos, -acc, acc))      # exp of non-positive
            acc = jnp.where(pos, 1.0 / (1.0 + z), z / (1.0 + z))
        o_ref[0] = acc.reshape(H, Wp, coutp)[:, :W, :].astype(o_ref.dtype)

    return kernel


def head_forward(hp, x, task_len, fuse_sigmoid):
    """HeadShared.forward as ONE fused pallas_call per pyramid level.

    TODO(synk): at production sizes (P3 ~ 100x167x256) this whole-level block
    should be row-strip tiled (5-row halo for the 5-conv receptive field) to
    fit v7x's 64 MiB VMEM and to expose a 'parallel' axis for megacore.
    TODO(synk): fold all 5 levels into one pallas_call per head with
    PrefetchScalarGridSpec level offsets so the shared weights stay
    VMEM-resident; mark the weight specs pipeline_mode=pl.Buffered(1).
    """
    N, H, W, C = x.shape
    coutp = hp["wf"].shape[-1]
    cout_real = hp["cout"]
    _, lead, rows = _flat_geom(H, W)
    out = pl.pallas_call(
        _make_head_kernel(H, W, C, coutp, fuse_sigmoid, lead),
        out_shape=jax.ShapeDtypeStruct((N, H, W, coutp), jnp.bfloat16),
        grid=(N,),
        in_specs=[
            pl.BlockSpec((1, H, W, C), lambda n: (n, 0, 0, 0)),
            pl.BlockSpec(hp["wc"].shape, lambda n: (0, 0, 0, 0, 0)),
            pl.BlockSpec(hp["bc"].shape, lambda n: (0, 0, 0)),
            pl.BlockSpec(hp["wf"].shape, lambda n: (0, 0, 0, 0)),
            pl.BlockSpec(hp["bf"].shape, lambda n: (0, 0)),
        ],
        out_specs=pl.BlockSpec((1, H, W, coutp), lambda n: (n, 0, 0, 0)),
        scratch_shapes=[pltpu.VMEM((rows, C), jnp.bfloat16)],
        compiler_params=pltpu.CompilerParams(
            # 'arbitrary': the scratch border zeroed at step 0 is reused.
            dimension_semantics=("arbitrary",),
            vmem_limit_bytes=_vmem_limit()),
    )(x, hp["wc"], hp["bc"], hp["wf"], hp["bf"])
    out = out[:, :, :, :cout_real]                 # drop lane padding (0.5s)
    # NCHW permute(0,2,3,1)+reshape(N,-1,task_len) == NHWC reshape; deferred to
    # XLA so the Pallas output store stays lane-dense.
    return out.reshape(N, H * W * (cout_real // task_len), task_len)


# ---------------------------------------------------------------------------
# FPN conv kernels: 1x1 lateral (fused top-down add) and 3x3 smooth
# ---------------------------------------------------------------------------
def _make_conv1x1_kernel(H, W, cin, cout, has_add, relu):
    HW = H * W

    def compute(x_ref, w_ref, b_ref, a_ref, o_ref):
        acc = jnp.dot(x_ref[0].reshape(HW, cin), w_ref[0, 0],
                      preferred_element_type=jnp.float32)
        acc = acc + b_ref[...]
        if has_add:
            acc = acc + a_ref[0].reshape(HW, cout).astype(jnp.float32)
        if relu:
            acc = jnp.maximum(acc, 0.0)
        o_ref[0] = acc.reshape(H, W, cout).astype(o_ref.dtype)

    if has_add:
        def kernel(x_ref, w_ref, b_ref, a_ref, o_ref):
            compute(x_ref, w_ref, b_ref, a_ref, o_ref)
    else:
        def kernel(x_ref, w_ref, b_ref, o_ref):
            compute(x_ref, w_ref, b_ref, None, o_ref)
    return kernel


def _make_conv3x3_kernel(H, W, cin, cout, lead, relu):
    Wp = W + 2

    def kernel(x_ref, w_ref, b_ref, o_ref, pad_ref):
        @pl.when(pl.program_id(0) == 0)
        def _():
            pad_ref[...] = jnp.zeros_like(pad_ref)
        _fill_interior(pad_ref, lambda y: x_ref[0, y], H, W, lead)
        acc = _conv3x3_flat(pad_ref, lambda dy, dx: w_ref[dy, dx],
                            H, W, cout, lead)
        acc = acc + b_ref[...]
        if relu:
            acc = jnp.maximum(acc, 0.0)
        o_ref[0] = acc.reshape(H, Wp, cout)[:, :W, :].astype(o_ref.dtype)

    return kernel


def conv_block(x, p, add=None, relu=False):
    """Pallas NHWC conv ('same', stride 1) for FPN laterals / smooths.

    TODO(synk): row-tile at production sizes (lat3/smooth3 ~100x167) so the
    per-level blocks stay within v7x's 64 MiB VMEM.
    """
    N, H, W, cin = x.shape
    w, b = p["w"], p["b"]
    k, cout = w.shape[0], w.shape[3]
    in_specs = [
        pl.BlockSpec((1, H, W, cin), lambda n: (n, 0, 0, 0)),
        pl.BlockSpec((k, k, cin, cout), lambda n: (0, 0, 0, 0)),
        pl.BlockSpec((1, cout), lambda n: (0, 0)),
    ]
    args = [x, w, b]
    scratch = []
    if k == 3:
        assert add is None
        _, lead, rows = _flat_geom(H, W)
        scratch = [pltpu.VMEM((rows, cin), jnp.bfloat16)]
        kernel = _make_conv3x3_kernel(H, W, cin, cout, lead, relu)
        semantics = ("arbitrary",)     # scratch border reused across steps
    else:
        if add is not None:
            in_specs.append(pl.BlockSpec((1, H, W, cout), lambda n: (n, 0, 0, 0)))
            args.append(add)
        kernel = _make_conv1x1_kernel(H, W, cin, cout, add is not None, relu)
        semantics = ("parallel",)      # no scratch state -> megacore friendly
    return pl.pallas_call(
        kernel,
        out_shape=jax.ShapeDtypeStruct((N, H, W, cout), jnp.bfloat16),
        grid=(N,),
        in_specs=in_specs,
        out_specs=pl.BlockSpec((1, H, W, cout), lambda n: (n, 0, 0, 0)),
        scratch_shapes=scratch,
        compiler_params=pltpu.CompilerParams(
            dimension_semantics=semantics,
            vmem_limit_bytes=_vmem_limit()),
    )(*args)


# ---------------------------------------------------------------------------
# XLA convs for the tiny-channel stand-in stem and the stride-2 P6/P7 convs.
# ---------------------------------------------------------------------------
def xla_conv(x, p, stride=1, relu=False):
    # TODO(synk): tiny-channel stand-in stem and stride-2 P6/P7 are left to
    # XLA's packed convolution (direct striding; a Pallas kernel here would
    # waste MXU lanes on Cin=3/8 and 4x FLOPs on stride-2).
    w, b = p["w"], p["b"]
    pad = w.shape[0] // 2
    out = lax.conv_general_dilated(
        x, w, window_strides=(stride, stride),
        padding=((pad, pad), (pad, pad)),
        dimension_numbers=("NHWC", "HWIO", "NHWC"),
        preferred_element_type=jnp.float32)
    out = out + b.reshape(1, 1, 1, -1)
    if relu:
        out = jnp.maximum(out, 0.0)
    return out.astype(jnp.bfloat16)


# ---------------------------------------------------------------------------
# Parameter construction (deterministic, synthetic)
# ---------------------------------------------------------------------------
def _conv_params(key, k, cin, cout):
    w = jax.random.normal(key, (k, k, cin, cout), jnp.float32)
    w = w * (1.0 / math.sqrt(k * k * cin))
    return {"w": w.astype(jnp.bfloat16), "b": jnp.zeros((1, cout), jnp.float32)}


def _head_params(keys, c, num_anchors, task_len):
    convs = [_conv_params(next(keys), 3, c, c) for _ in range(4)]
    cout_real = num_anchors * task_len
    coutp = _round_up(cout_real, 128)            # lane-dense final conv output
    wf = jax.random.normal(next(keys), (3, 3, c, cout_real), jnp.float32)
    wf = wf * (1.0 / math.sqrt(9 * c))
    # NOTE: with real RetinaNet weights the output channels must stay
    # anchor-major / task-minor so the NHWC reshape matches torch's
    # permute(0,2,3,1).reshape(N,-1,task_len).
    wf = jnp.pad(wf, ((0, 0), (0, 0), (0, 0), (0, coutp - cout_real)))
    return {
        "wc": jnp.stack([q["w"] for q in convs]),     # (4,3,3,c,c) bf16
        "bc": jnp.stack([q["b"] for q in convs]),     # (4,1,c)     f32
        "wf": wf.astype(jnp.bfloat16),                # (3,3,c,coutp) bf16
        "bf": jnp.zeros((1, coutp), jnp.float32),
        "cout": cout_real,
    }


def init_params(key, cins, cout, num_anchors, num_classes):
    keys = iter(jax.random.split(key, 64))
    p = {}
    # TODO(synk): ResNet50 backbone (frozen BN, num_freeze=5) not provided;
    # replaced by a small strided-conv stand-in at the same output strides.
    p["stem1"] = _conv_params(next(keys), 3, 3, 8)               # /2
    p["stem2"] = _conv_params(next(keys), 3, 8, 8)               # /4
    p["stem3"] = _conv_params(next(keys), 3, 8, cins[0])         # /8  -> C3
    p["down4"] = _conv_params(next(keys), 3, cins[0], cins[1])   # /16 -> C4
    p["down5"] = _conv_params(next(keys), 3, cins[1], cins[2])   # /32 -> C5
    # FPN: 1x1 laterals + 3x3 smooths (smoothP5=True), P6 fromP5, P7=True
    p["lat3"] = _conv_params(next(keys), 1, cins[0], cout)
    p["lat4"] = _conv_params(next(keys), 1, cins[1], cout)
    p["lat5"] = _conv_params(next(keys), 1, cins[2], cout)
    p["smooth3"] = _conv_params(next(keys), 3, cout, cout)
    p["smooth4"] = _conv_params(next(keys), 3, cout, cout)
    p["smooth5"] = _conv_params(next(keys), 3, cout, cout)
    p["p6"] = _conv_params(next(keys), 3, cout, cout)
    p["p7"] = _conv_params(next(keys), 3, cout, cout)
    # shared heads (HeadShared)
    p["cls_head"] = _head_params(keys, cout, num_anchors, num_classes)
    p["reg_head"] = _head_params(keys, cout, num_anchors, 4)
    return p


# ---------------------------------------------------------------------------
# Forward pass (glue in plain JAX, compute in Pallas)
# ---------------------------------------------------------------------------
def _upsample_to(x, like):
    """Nearest-neighbour 2x upsample, cropped to the target's spatial size.

    TODO(synk): fuse this into the lateral conv kernel to avoid materializing
    the full-resolution tensor in HBM (biggest relative win on v5e HBM BW).
    """
    up = jnp.repeat(jnp.repeat(x, 2, axis=1), 2, axis=2)
    return up[:, :like.shape[1], :like.shape[2], :]


def retinanet_forward(params, imgs_nchw, num_classes):
    # TODO(synk): preprocess() (resize to (800,1333), torch-style normalize)
    # not reproducible from the given source; raw input is used.
    x = jnp.transpose(imgs_nchw, (0, 2, 3, 1)).astype(jnp.bfloat16)   # NHWC

    # stand-in backbone (XLA convs; see TODO in xla_conv / init_params)
    t = xla_conv(x, params["stem1"], stride=2, relu=True)
    t = xla_conv(t, params["stem2"], stride=2, relu=True)
    c3 = xla_conv(t, params["stem3"], stride=2, relu=True)
    c4 = xla_conv(c3, params["down4"], stride=2, relu=True)
    c5 = xla_conv(c4, params["down5"], stride=2, relu=True)

    # TODO(synk): FeaturePyramidNetwork internals not provided; standard FPN
    # top-down with P6='fromP5', P7=True, smoothP5=True assumed.
    l5 = conv_block(c5, params["lat5"])
    l4 = conv_block(c4, params["lat4"], add=_upsample_to(l5, c4))
    l3 = conv_block(c3, params["lat3"], add=_upsample_to(l4, c3))
    p3 = conv_block(l3, params["smooth3"])
    p4 = conv_block(l4, params["smooth4"])
    p5 = conv_block(l5, params["smooth5"])
    p6 = xla_conv(p5, params["p6"], stride=2)
    p7 = xla_conv(jnp.maximum(p6, 0.0).astype(jnp.bfloat16),
                  params["p7"], stride=2)
    xs = [p3, p4, p5, p6, p7]

    reg = [head_forward(params["reg_head"], lvl, 4, fuse_sigmoid=False)
           for lvl in xs]
    scr = [head_forward(params["cls_head"], lvl, num_classes, fuse_sigmoid=True)
           for lvl in xs]
    lvlen = [lvl.shape[1] for lvl in scr]
    reg = jnp.concatenate(reg, axis=1)
    scr = jnp.concatenate(scr, axis=1)

    # TODO(synk): make_anchors/get_priors and postprocess (top_per_level,
    # decode_boxes, clamp_to_canvas, final_nms, scale_boxes) rely on dynamic
    # shapes and unprovided code; raw per-anchor regressions + scores returned.
    return reg, scr, lvlen


# ---------------------------------------------------------------------------
if __name__ == "__main__":
    # small synthetic config (real: cins=[512,1024,2048], cout=256, classes=91)
    CINS = [16, 32, 64]
    COUT = 16
    NUM_CLASSES = 8
    ANCHORS_PER_LEVEL = 9   # 3 scales x 3 ratios, as in make_anchors(...)

    key = jax.random.PRNGKey(0)
    imgs = jax.random.uniform(key, (2, 3, 128, 128), jnp.float32)   # NCHW input

    params = init_params(jax.random.PRNGKey(42), CINS, COUT,
                         ANCHORS_PER_LEVEL, NUM_CLASSES)

    fwd = partial(retinanet_forward, num_classes=NUM_CLASSES)
    reg, scr, lvlen = fwd(params, imgs)
    jax.block_until_ready(reg)
    jax.block_until_ready(scr)

    total = sum(lvlen)
    assert reg.shape == (2, total, 4), reg.shape
    assert scr.shape == (2, total, NUM_CLASSES), scr.shape
    assert bool(jnp.all(jnp.isfinite(reg))) and bool(jnp.all(jnp.isfinite(scr)))
    assert bool(jnp.all(scr >= 0.0)) and bool(jnp.all(scr <= 1.0))
    print("KERNEL_OK")
</pallas_src>

<mosaic_0001>
module attributes {stable_mosaic.version = 11 : i64} {
  func.func @kernel(%arg0: i32, %arg1: memref<1x4x4x64xbf16, #tpu.memory_space<vmem>>, %arg2: memref<1x1x64x16xbf16, #tpu.memory_space<vmem>>, %arg3: memref<1x16xf32, #tpu.memory_space<vmem>>, %arg4: memref<1x4x4x16xbf16, #tpu.memory_space<vmem>>) attributes {dimension_semantics = [#tpu.dimension_semantics<parallel>], iteration_bounds = array<i64: 2>, scalar_prefetch = 0 : i64, scratch_operands = 0 : i64, tpu.core_type = #tpu.core_type<tc>, window_params = [{transform_indices = @transform_0, window_bounds = array<i64: 1, 4, 4, 64>}, {pipeline_mode = #tpu.pipeline_mode<synchronous>, transform_indices = @transform_1, window_bounds = array<i64: 1, 1, 64, 16>}, {pipeline_mode = #tpu.pipeline_mode<synchronous>, transform_indices = @transform_2, window_bounds = array<i64: 1, 16>}, {transform_indices = @transform_3, window_bounds = array<i64: 1, 4, 4, 16>}]} {
    %c0 = arith.constant 0 : index
    %c0_0 = arith.constant 0 : index
    %c0_1 = arith.constant 0 : index
    %c0_2 = arith.constant 0 : index
    %0 = vector.load %arg1[%c0, %c0_0, %c0_1, %c0_2] : memref<1x4x4x64xbf16, #tpu.memory_space<vmem>>, vector<1x4x4x64xbf16>
    %1 = vector.shape_cast %0 : vector<1x4x4x64xbf16> to vector<4x4x64xbf16>
    %2 = vector.shape_cast %1 : vector<4x4x64xbf16> to vector<16x64xbf16>
    %c0_3 = arith.constant 0 : index
    %c0_4 = arith.constant 0 : index
    %c0_5 = arith.constant 0 : index
    %c0_6 = arith.constant 0 : index
    %3 = vector.load %arg2[%c0_3, %c0_4, %c0_5, %c0_6] : memref<1x1x64x16xbf16, #tpu.memory_space<vmem>>, vector<1x1x64x16xbf16>
    %4 = vector.shape_cast %3 : vector<1x1x64x16xbf16> to vector<64x16xbf16>
    %cst = arith.constant dense<0.000000e+00> : vector<16x16xf32>
    %5 = tpu.matmul %2, %4, %cst {dimension_numbers = #tpu.dot_dimension_numbers<[1], [0], [0], [1], [0, 0, 1, 1], [], []>} : vector<16x64xbf16>, vector<64x16xbf16>, vector<16x16xf32> -> vector<16x16xf32>
    %c0_7 = arith.constant 0 : index
    %c0_8 = arith.constant 0 : index
    %6 = vector.load %arg3[%c0_7, %c0_8] : memref<1x16xf32, #tpu.memory_space<vmem>>, vector<1x16xf32>
    %7 = vector.broadcast %6 : vector<1x16xf32> to vector<16x16xf32>
    %8 = arith.addf %5, %7 : vector<16x16xf32>
    %9 = vector.shape_cast %8 : vector<16x16xf32> to vector<4x4x16xf32>
    %10 = arith.truncf %9 : vector<4x4x16xf32> to vector<4x4x16xbf16>
    %c0_9 = arith.constant 0 : index
    %c0_10 = arith.constant 0 : index
    %c0_11 = arith.constant 0 : index
    %c0_12 = arith.constant 0 : index
    %11 = vector.load %arg4[%c0_9, %c0_10, %c0_11, %c0_12] : memref<1x4x4x16xbf16, #tpu.memory_space<vmem>>, vector<1x4x4x16xbf16>
    %12 = vector.shape_cast %11 : vector<1x4x4x16xbf16> to vector<4x4x16xbf16>
    %13 = vector.shape_cast %10 : vector<4x4x16xbf16> to vector<1x4x4x16xbf16>
    tpu.vector_store %arg4[%c0_9, %c0_10, %c0_11, %c0_12], %13 {strides = array<i32>} : memref<1x4x4x16xbf16, #tpu.memory_space<vmem>>, vector<1x4x4x16xbf16>,
    return
  }
  func.func @transform_0(%arg0: i32) -> (i32, i32, i32, i32) {
    %c0_i32 = arith.constant 0 : i32
    %c0_i32_0 = arith.constant 0 : i32
    %c0_i32_1 = arith.constant 0 : i32
    %c0_i32_2 = arith.constant 0 : i32
    return %arg0, %c0_i32, %c0_i32_0, %c0_i32_1 : i32, i32, i32, i32
  }
  func.func @transform_1(%arg0: i32) -> (i32, i32, i32, i32) {
    %c0_i32 = arith.constant 0 : i32
    %c0_i32_0 = arith.constant 0 : i32
    %c0_i32_1 = arith.constant 0 : i32
    %c0_i32_2 = arith.constant 0 : i32
    %c0_i32_3 = arith.constant 0 : i32
    return %c0_i32, %c0_i32_0, %c0_i32_1, %c0_i32_2 : i32, i32, i32, i32
  }
  func.func @transform_2(%arg0: i32) -> (i32, i32) {
    %c0_i32 = arith.constant 0 : i32
    %c0_i32_0 = arith.constant 0 : i32
    %c0_i32_1 = arith.constant 0 : i32
    return %c0_i32, %c0_i32_0 : i32, i32
  }
  func.func @transform_3(%arg0: i32) -> (i32, i32, i32, i32) {
    %c0_i32 = arith.constant 0 : i32
    %c0_i32_0 = arith.constant 0 : i32
    %c0_i32_1 = arith.constant 0 : i32
    %c0_i32_2 = arith.constant 0 : i32
    return %arg0, %c0_i32, %c0_i32_0, %c0_i32_1 : i32, i32, i32, i32
  }
}

</mosaic_0001>

<llo_original>
// kernel: tpu_custom_call.1
$region0: #{tpu_custom_call.1}
  #allocation0 [shape = 'u32[]', space=smem, size = 0x4, offset = 0x4, fixed_abs, tag = 'smem constant byte address 0x4 - core index']
  #allocation1 [shape = 'u32[72,128]{1,0:T(1,128)}', space=vmem, size = 0x9000, scoped, tag = 'internal scratch']
  %s0 = inlined_call_operand.vmem [shape: bf16[2,4,4,64], index: 0, kind: input, shape index: {}]
  %s1 = inlined_call_operand.vmem [shape: bf16[1,1,64,16], index: 1, kind: input, shape index: {}]
  %s2 = inlined_call_operand.vmem [shape: f32[1,16], index: 2, kind: input, shape index: {}]
  %s3 = inlined_call_operand.hbm [shape: bf16[2,4,4,16], index: 3, kind: output, shape index: {}]
  %s4 = sld [smem:[#allocation0]]
  $region45: #{tpu_custom_call.1} parent=0
    _
  %s6 = ssub.s32 1, %s4
  %s7 = scalar_select 0, %s6, %s4
  $region1: #{tpu_custom_call.1} parent=0
    #allocation2 [shape = 'u8[8192]{0}', space=vmem, size = 0x2000, scoped, tag = 'output window, operand 0']
    #allocation3 [shape = 's32[2]{0}', space=sflag, size = 0x8, scoped, tag = 'scoped memory for tpu_custom_call.1']
    %8 = vsyncpa [#allocation3], 0
    %s9 = scalar_lea.sflag [#allocation3], 1
    %10 = vsyncpa %s9, 0
    loop: start=0, step=1, limit=4
    $region2: #{tpu_custom_call.1} parent=1 // loop_pre_header
      _
    $region3: #{tpu_custom_call.1} parent=1 // loop_header
      %s12 = sphi 0, %s16
      %p13 = scmp.ge.s32.totalorder %s12, 4
      %s22 = sphi 0, %s24
      %s25 = sphi 0, %s22
      %s26 = sphi 0, %s25
      %s42 = sphi 0, %s26
      %s46 = sphi 0, %s46
      %s48 = sphi 0, %s46
      %s49 = sphi 0, %s48
      %s63 = sphi 0, %s49
      %s67 = sphi 0, %s67
      %s69 = sphi 0, %s67
      %s70 = sphi 0, %s69
      %s84 = sphi 0, %s70
      %s90 = sphi 0, %s92
      %s93 = sphi 0, %s90
      %s94 = sphi 0, %s93
      %s110 = sphi 0, %s94
    $region4: #{tpu_custom_call.1} parent=1 // loop_header_branch
      %15 = sbr.rel (%p13) target = $region8
    $region5: #{tpu_custom_call.1} parent=1 // loop_body
      %s17 = ssub.s32 %s12, 1
      %s18 = ssub.s32 %s12, 2
      %s19 = sadd.s32 %s12, 1
      %s20 = ssub.s32 %s12, %s19
      %p21 = scmp.eq.s32.totalorder %s20, 0
      %s23 = sadd.s32 %s22, 1
      %s24 = scalar_select %p21, %s22, %s23
      %p27 = pneg %p21
      %p28 = scmp.eq.s32.totalorder %s12, 1
      %p29 = por %p27, %p28
      %p30 = scmp.ne.s32.totalorder %s22, %s25
      %p31 = scmp.eq.s32.totalorder %s12, 0
      %p32 = por %p30, %p31
      %p33 = scmp.ne.s32.totalorder %s22, %s25
      %p34 = scmp.eq.s32.totalorder %s17, 1
      %p35 = por %p33, %p34
      %p36 = scmp.ne.s32.totalorder %s25, %s26
      %p37 = scmp.eq.s32.totalorder %s17, 0
      %p38 = por %p36, %p37
      %p39 = scmp.ne.s32.totalorder %s25, %s26
      %p40 = scmp.eq.s32.totalorder %s18, 1
      %p41 = por %p39, %p40
      %p43 = scmp.ne.s32.totalorder %s26, %s42
      %p44 = scmp.eq.s32.totalorder %s18, 0
      %p45 = por %p43, %p44
      %s47 = sadd.s32 %s46, 1
      %p50 = scmp.eq.s32.totalorder %s12, 1
      %p51 = scmp.ne.s32.totalorder %s46, %s48
      %p52 = scmp.eq.s32.totalorder %s12, 0
      %p53 = por %p51, %p52
      %p54 = scmp.ne.s32.totalorder %s46, %s48
      %p55 = scmp.eq.s32.totalorder %s17, 1
      %p56 = por %p54, %p55
      %p57 = scmp.ne.s32.totalorder %s48, %s49
      %p58 = scmp.eq.s32.totalorder %s17, 0
      %p59 = por %p57, %p58
      %p60 = scmp.ne.s32.totalorder %s48, %s49
      %p61 = scmp.eq.s32.totalorder %s18, 1
      %p62 = por %p60, %p61
      %p64 = scmp.ne.s32.totalorder %s49, %s63
      %p65 = scmp.eq.s32.totalorder %s18, 0
      %p66 = por %p64, %p65
      %s68 = sadd.s32 %s67, 1
      %p71 = scmp.eq.s32.totalorder %s12, 1
      %p72 = scmp.ne.s32.totalorder %s67, %s69
      %p73 = scmp.eq.s32.totalorder %s12, 0
      %p74 = por %p72, %p73
      %p75 = scmp.ne.s32.totalorder %s67, %s69
      %p76 = scmp.eq.s32.totalorder %s17, 1
      %p77 = por %p75, %p76
      %p78 = scmp.ne.s32.totalorder %s69, %s70
      %p79 = scmp.eq.s32.totalorder %s17, 0
      %p80 = por %p78, %p79
      %p81 = scmp.ne.s32.totalorder %s69, %s70
      %p82 = scmp.eq.s32.totalorder %s18, 1
      %p83 = por %p81, %p82
      %p85 = scmp.ne.s32.totalorder %s70, %s84
      %p86 = scmp.eq.s32.totalorder %s18, 0
      %p87 = por %p85, %p86
      %s88 = ssub.s32 %s12, %s19
      %p89 = scmp.eq.s32.totalorder %s88, 0
      %s91 = sadd.s32 %s90, 1
      %s92 = scalar_select %p89, %s90, %s91
      %p95 = pneg %p89
      %p96 = scmp.eq.s32.totalorder %s12, 1
      %p97 = por %p95, %p96
      %p98 = scmp.ne.s32.totalorder %s90, %s93
      %p99 = scmp.eq.s32.totalorder %s12, 0
      %p100 = por %p98, %p99
      %p101 = scmp.ne.s32.totalorder %s90, %s93
      %p102 = scmp.eq.s32.totalorder %s17, 1
      %p103 = por %p101, %p102
      %p104 = scmp.ne.s32.totalorder %s93, %s94
      %p105 = scmp.eq.s32.totalorder %s17, 0
      %p106 = por %p104, %p105
      %p107 = scmp.ne.s32.totalorder %s93, %s94
      %p108 = scmp.eq.s32.totalorder %s18, 1
      %p109 = por %p107, %p108
      %p111 = scmp.ne.s32.totalorder %s94, %s110
      %p112 = scmp.eq.s32.totalorder %s18, 0
      %p113 = por %p111, %p112
      %p114 = scmp.le.s32.totalorder 1, %s12
      %p115 = scmp.lt.s32.totalorder %s12, 3
      %p116 = pnand %p114, %p115
      %p117 = pneg %p116
      // Predicated region
      $region9: #{tpu_custom_call.1} parent=5 // pred_check
        _
      $region10: #{tpu_custom_call.1} parent=5 // pred_check_branch
        %119 = sbr.rel (%p116) target = $region12
      $region11: #{tpu_custom_call.1} parent=5 // pred_region
        %s120 = ssub.s32 %s12, 1
        // Predicated region
        $region13: #{tpu_custom_call.1} parent=11 // pred_check
          %p121 = pneg %p59
        $region14: #{tpu_custom_call.1} parent=11 // pred_check_branch
          %123 = sbr.rel (%p121) target = $region16
        $region15: #{tpu_custom_call.1} parent=11 // pred_region
          _
        $region16: #{tpu_custom_call.1} parent=11 // pred_fallthru
          _
        // Predicated region
        $region17: #{tpu_custom_call.1} parent=11 // pred_check
          %p124 = pneg %p80
        $region18: #{tpu_custom_call.1} parent=11 // pred_check_branch
          %126 = sbr.rel (%p124) target = $region20
        $region19: #{tpu_custom_call.1} parent=11 // pred_region
          _
        $region20: #{tpu_custom_call.1} parent=11 // pred_fallthru
          _
      $region12: #{tpu_custom_call.1} parent=5 // pred_fallthru
        _
      %p127 = scmp.lt.s32.totalorder %s12, 2
      // Predicated region
      $region21: #{tpu_custom_call.1} parent=5 // pred_check
        %p128 = pneg %p127
      $region22: #{tpu_custom_call.1} parent=5 // pred_check_branch
        %130 = sbr.rel (%p128) target = $region24
      $region23: #{tpu_custom_call.1} parent=5 // pred_region
        // Predicated region
        $region25: #{tpu_custom_call.1} parent=23 // pred_check
          %p131 = pneg %p32
        $region26: #{tpu_custom_call.1} parent=23 // pred_check_branch
          %133 = sbr.rel (%p131) target = $region28
        $region27: #{tpu_custom_call.1} parent=23 // pred_region
          %p134 = scmp.lt.s32.totalorder %s12, 1
          %s135 = scalar_select %p134, %s12, 1
          %s136 = smul.addr %s135, 4
          %s137 = smul.addr %s136, 2
          %s138 = scalar_lea.vmem %s0, %s137
        $region28: #{tpu_custom_call.1} parent=23 // pred_fallthru
          _
      $region24: #{tpu_custom_call.1} parent=5 // pred_fallthru
        _
      %p139 = scmp.le.s32.totalorder 1, %s12
      %p140 = scmp.lt.s32.totalorder %s12, 3
      %p141 = pnand %p139, %p140
      %p142 = pneg %p141
      // Predicated region
      $region29: #{tpu_custom_call.1} parent=5 // pred_check
        _
      $region30: #{tpu_custom_call.1} parent=5 // pred_check_branch
        %144 = sbr.rel (%p141) target = $region32
      $region31: #{tpu_custom_call.1} parent=5 // pred_region
        %s145 = ssub.s32 %s12, 1
        %p146 = scmp.lt.s32.totalorder %s17, 1
        %s147 = scalar_select %p146, %s17, 1
        %s148 = smul.addr %s147, 4
        %s149 = smul.addr %s148, 2
        %s150 = scalar_lea.vmem %s0, %s149
        %p151 = pneg %p38
        %p152 = pneg %p35
        %p153 = pneg %p59
        %p154 = pneg %p56
        %p155 = pneg %p80
        %p156 = pneg %p77
        %p157 = pneg %p106
        %p158 = pneg %p103
        %s159 = sand.u32 %s93, 1
        %s160 = scalar_lea.sflag [#allocation3], %s159
        %s161 = sand.u32 %s93, 1
        %s162 = smul.addr %s161, 8
        %s163 = scalar_lea.vmem [#allocation2], %s162
        %p164 = scmp.lt.s32.totalorder %s17, 1
        %s165 = scalar_select %p164, %s17, 1
        %s166 = smul.addr %s165, 4
        %s167 = smul.addr %s166, 2
        %s168 = scalar_lea.vmem %s0, %s167
        %v170 = vld [vmem:[%s168] sm:$0x3]
        %v171 = vld [vmem:[%s168 + $0x2] sm:$0x3]
        %v172 = vld [vmem:[%s168 + $0x4] sm:$0x3]
        %v173 = vld [vmem:[%s168 + $0x6] sm:$0x3]
        %v174 = vld [vmem:[%s1] sm:$0xf]
        %v175 = vld [vmem:[%s1 + $0x4] sm:$0xf]
        %v176 = vld [vmem:[%s1 + $0x8] sm:$0xf]
        %v177 = vld [vmem:[%s1 + $0xc] sm:$0xf]
        %v178 = vld [vmem:[%s1 + $0x10] sm:$0xf]
        %v179 = vld [vmem:[%s1 + $0x14] sm:$0xf]
        %v180 = vld [vmem:[%s1 + $0x18] sm:$0xf]
        %v181 = vld [vmem:[%s1 + $0x1c] sm:$0xf]
        %v182 = vld [vmem:[%s2] sm:$0x1]
        %v184 = vperm.slane %v182, 0
        %187 = vst [vmem:[#allocation1] ss:$4 sm:$0xff] %v170
        %s189 = scalar_lea.vmem [#allocation1], 1
        %190 = vst [vmem:[%s189] ss:$4 sm:$0xff] %v171
        %s192 = scalar_lea.vmem [#allocation1], 2
        %193 = vst [vmem:[%s192] ss:$4 sm:$0xff] %v172
        %s195 = scalar_lea.vmem [#allocation1], 3
        %196 = vst [vmem:[%s195] ss:$4 sm:$0xff] %v173
        %v197 = vld.sshfl [vmem:[#allocation1] sm:$0xff pattern:$0x73625140]
        %v206 = vunpack.c.l.b16 %v174
        %v207 = vunpack.c.l.b16 %v175
        %v208 = vunpack.c.l.b16 %v176
        %v209 = vunpack.c.l.b16 %v177
        %v210 = vunpack.c.l.b16 %v178
        %v211 = vunpack.c.l.b16 %v179
        %v212 = vunpack.c.l.b16 %v180
        %v213 = vunpack.c.l.b16 %v181
        %v214 = vpack.c.b16 %v207, %v206
        %v215 = vpack.c.b16 %v209, %v208
        %v216 = vpack.c.b16 %v211, %v210
        %v217 = vpack.c.b16 %v213, %v212
        %vm222 = vcmask 523264
        %v223 = vsel %vm222, %v197, 0
        %225 = vmatpush.bf16.msra.mxu0 0
        %226 = vmatpush.bf16.msra.mxu0 0
        %227 = vmatpush.bf16.msra.mxu0 0
        %228 = vmatpush.bf16.msra.mxu0 0
        %229 = vmatpush.bf16.msra.mxu0 %v217
        %230 = vmatpush.bf16.msra.mxu0 %v216
        %231 = vmatpush.bf16.msra.mxu0 %v215
        %232 = vmatpush.bf16.msra.mxu0 %v214
        %233 = vmatmul.bf16.gmra.mxu0 %v223
        %v234 = vpop.f32.mrf.mxu0
        %v235 = vadd.f32 %v184, %v234
        %v236 = vpop.f32.mrf.mxu0
        %v237 = vadd.f32 %v184, %v236
        %238 = vdwg.mxu0
        %v241 = vrot.slane %v235, 4
        %v242 = vrot.slane %v237, 4
        %v245 = vpack.c.bf16 %v235, %v235
        %v246 = vpack.c.bf16 %v241, %v241
        %v247 = vpack.c.bf16 %v237, %v237
        %v248 = vpack.c.bf16 %v242, %v242
        %vm249 = vcmask 123904
        %250 = vst.msk [vmem:[%s163] sm:$0x3] %vm249, %v245
        %251 = vst.msk [vmem:[%s163 + $0x2] sm:$0x3] %vm249, %v246
        %252 = vst.msk [vmem:[%s163 + $0x4] sm:$0x3] %vm249, %v247
        %253 = vst.msk [vmem:[%s163 + $0x6] sm:$0x3] %vm249, %v248
        %s254 = sand.u32 %s93, 1
        %s255 = scalar_lea.sflag [#allocation3], %s254
        %s256 = sand.u32 %s93, 1
        %s257 = smul.addr %s256, 8
        %s258 = scalar_lea.vmem [#allocation2], %s257
        // Predicated region
        $region33: #{tpu_custom_call.1} parent=31 // pred_check
          %p259 = pneg %p103
        $region34: #{tpu_custom_call.1} parent=31 // pred_check_branch
          %261 = sbr.rel (%p259) target = $region36
        $region35: #{tpu_custom_call.1} parent=31 // pred_region
          %263 = vsyncadd %s255, 0
          %s264 = smul.addr %s17, 4
          %s265 = smul.addr %s264, 2
          %s266 = scalar_lea.hbm %s3, %s265
          %s267 = sshll.u32 %s258, 4
          %s268 = int_to_ptr.vmem [resolvable:$true] %s267
          %s269 = sshll.u32 %s266, 4
          %s270 = int_to_ptr.hbm [resolvable:$true] %s269
          %275 = dma.vmem_to_hbm [thread:$0]  %s268, 128, %s270, %s255, 32, 32, 2
        $region36: #{tpu_custom_call.1} parent=31 // pred_fallthru
          _
      $region32: #{tpu_custom_call.1} parent=5 // pred_fallthru
        _
      %p276 = scmp.le.s32.totalorder 2, %s12
      // Predicated region
      $region37: #{tpu_custom_call.1} parent=5 // pred_check
        %p277 = pneg %p276
      $region38: #{tpu_custom_call.1} parent=5 // pred_check_branch
        %279 = sbr.rel (%p277) target = $region40
      $region39: #{tpu_custom_call.1} parent=5 // pred_region
        %s280 = ssub.s32 %s12, 2
        // Predicated region
        $region41: #{tpu_custom_call.1} parent=39 // pred_check
          %p281 = pneg %p109
        $region42: #{tpu_custom_call.1} parent=39 // pred_check_branch
          %283 = sbr.rel (%p281) target = $region44
        $region43: #{tpu_custom_call.1} parent=39 // pred_region
          %s284 = sand.u32 %s94, 1
          %s285 = scalar_lea.sflag [#allocation3], %s284
          %s286 = sand.u32 %s94, 1
          %s287 = smul.addr %s286, 8
          %s288 = scalar_lea.vmem [#allocation2], %s287
          %290 = dma.done %s285, 128
        $region44: #{tpu_custom_call.1} parent=39 // pred_fallthru
          _
      $region40: #{tpu_custom_call.1} parent=5 // pred_fallthru
        _
    $region6: #{tpu_custom_call.1} parent=1 // loop_footer
      %s16 = sadd.s32 1, %s12
    $region7: #{tpu_custom_call.1} parent=1 // loop_footer_branch
      %11 = sbr.rel target = $region3
    $region8: #{tpu_custom_call.1} parent=1 // loop_exit
      _
    %291 = vsyncpa [#allocation3], 1
    %s292 = scalar_lea.sflag [#allocation3], 1
    %293 = vsyncpa %s292, 1

</llo_original>
